<compile_context>
chip_gen: v5e
topology: v5e:2x2
jax: 0.10.0
libtpu: 0.0.40
codegen_flags: <defaults>
</compile_context>

<pallas_src>
import math

import jax
import jax.numpy as jnp
from jax.experimental import pallas as pl
from jax.experimental.pallas import tpu as pltpu

B, S, H = 2, 8, 32          # batch, seq_length, hidden_size
HEADS = 4
D = H // HEADS              # attention_head_size
FF = 64                     # feedforward_size
EPS = 1e-6                  # layernorm_eps
SCALE = 1.0 / math.sqrt(float(D))
H3 = 3 * H
LANES = 128                 # packed-parameter lane width (full vreg lanes)
W_ROWS = 3 * H + FF         # 160 packed weight rows (all slab offsets 16-row aligned)


def _gelu_fast(x):
    # TencentPretrain gelu_fast: 0.5*x*(1+tanh(0.79788456*x*(1+0.044715*x*x)))
    return 0.5 * x * (1.0 + jnp.tanh(0.7978845608028654 * x * (1.0 + 0.044715 * x * x)))


def _layer_norm(x, gamma, beta):
    # TencentPretrain "normal" LayerNorm: unbiased std (ddof=1), eps added to the std.
    n = x.shape[-1]
    mean = jnp.mean(x, axis=-1, keepdims=True)
    cen = x - mean
    var = jnp.sum(cen * cen, axis=-1, keepdims=True) * (1.0 / (n - 1))
    inv = pl.reciprocal(jnp.sqrt(var) + EPS, approx=True)   # divide moved to the EUP slot
    return gamma * (cen * inv) + beta


def transformer_layer_kernel(x_ref, w_ref, p_ref, out_ref):
    # One batch's rows per grid step: x_ref block is (S, H) f32.
    x = x_ref[...]                                   # (8, 32) f32
    x_bf = x.astype(jnp.bfloat16)                    # bf16 operand for the MXU

    # ---- full-lane, sublane/packing-aligned parameter loads (unmasked vld) ----
    w_qkv = w_ref[0:H, :]                            # (32, 128) bf16, lanes 96:128 zero
    w_o   = w_ref[H:2 * H, :]                        # (32, 128) bf16, lanes 32:  zero
    w_1   = w_ref[2 * H:3 * H, :]                    # (32, 128) bf16, lanes 64:  zero
    w_2   = w_ref[3 * H:3 * H + FF, :]               # (64, 128) bf16, lanes 32:  zero

    p_all = p_ref[...]                               # (8, 128) f32 — exactly one vreg
    b_qkv = p_all[0:1, :]                            # (1, 128), SCALE already folded into Q part
    bo    = p_all[1:2, 0:H]
    b1    = p_all[2:3, 0:FF]
    b2    = p_all[3:4, 0:H]
    g1    = p_all[4:5, 0:H]
    be1   = p_all[5:6, 0:H]
    g2    = p_all[6:7, 0:H]
    be2   = p_all[7:8, 0:H]

    # ---- fused QKV projection: one bf16 matmul with f32 accumulation ----
    qkv = jnp.dot(x_bf, w_qkv, preferred_element_type=jnp.float32) + b_qkv   # (8, 128)

    # ---- causal additive mask generated in-register (matches generate_mask) ----
    row = jax.lax.broadcasted_iota(jnp.int32, (S, S), 0)
    col = jax.lax.broadcasted_iota(jnp.int32, (S, S), 1)
    mask = jnp.where(row >= col, jnp.float32(0.0), jnp.float32(-10000.0))    # (S, S)

    # ---- head split: single full-vreg transpose + tile-aligned reshape ----
    # qkv.T is the canonical (8,128)->(128,8) transpose; rows 0:96 = [sel, head, d].
    qkv_t = qkv.T[0:H3, :].reshape(3, HEADS, D, S)   # [sel, h, d, s]
    qh = qkv_t[0]                                    # (HEADS, D, S)
    kh = qkv_t[1]
    vh = qkv_t[2]

    # head-batched attention (scale pre-folded into Wq/bq)
    scores = jnp.einsum("hds,hdt->hst", qh, kh,
                        preferred_element_type=jnp.float32)                  # (HEADS, S, S)
    scores = scores + mask[None, :, :]
    m = jnp.max(scores, axis=-1, keepdims=True)
    e = jnp.exp(scores - m)
    probs = e * pl.reciprocal(jnp.sum(e, axis=-1, keepdims=True), approx=True)
    ctx = jnp.einsum("hst,hdt->hds", probs, vh,
                     preferred_element_type=jnp.float32)                     # (HEADS, D, S)

    # ---- head merge: tile-aligned reshape + one 2-D minor transpose ----
    ctx_m = ctx.reshape(H, S).T                                              # (S, H), head-major

    # output projection (bf16 operands, f32 accumulate); slab lanes beyond H are zero.
    attn = jnp.dot(ctx_m.astype(jnp.bfloat16), w_o,
                   preferred_element_type=jnp.float32)[:, 0:H] + bo          # (8, 32)

    # dropout_1 is identity (p=0 / eval); residual + layer_norm_1 (post-LN)
    inter = _layer_norm(attn + x, g1, be1)

    # ---- feed-forward (dense): linear -> gelu_fast -> linear ----
    ff = jnp.dot(inter.astype(jnp.bfloat16), w_1,
                 preferred_element_type=jnp.float32)[:, 0:FF] + b1           # (8, 64)
    ff = _gelu_fast(ff)
    ff = jnp.dot(ff.astype(jnp.bfloat16), w_2,
                 preferred_element_type=jnp.float32)[:, 0:H] + b2            # (8, 32)

    # dropout_2 is identity; residual + layer_norm_2; flat lane-contiguous row-block store.
    out_ref[...] = _layer_norm(ff + inter, g2, be2)


def _pack_params(params):
    (wq, bq, wk, bk, wv, bv, wo, bo, g1, be1, w1, b1, w2, b2, g2, be2) = params

    # fold attention scale 1/sqrt(D) into the Q projection at pack time
    wq_s, bq_s = wq * SCALE, bq * SCALE

    def slab(a):  # pad lanes to a full 128-wide slab
        return jnp.pad(a, ((0, 0), (0, LANES - a.shape[1])))

    w_qkv = jnp.concatenate([wq_s, wk, wv], axis=1)                          # (32, 96)
    W = jnp.concatenate([slab(w_qkv), slab(wo), slab(w1), slab(w2)], axis=0)  # (160, 128)
    b_qkv = jnp.concatenate([bq_s, bk, bv], axis=1)                          # (1, 96)
    P = jnp.concatenate([slab(b_qkv), slab(bo), slab(b1), slab(b2),
                         slab(g1), slab(be1), slab(g2), slab(be2)], axis=0)  # (8, 128)
    # bf16 matmul operands (f32 accumulation in-kernel); biases / LN params stay f32.
    return W.astype(jnp.bfloat16), P.astype(jnp.float32)


def parallel_transformer_layer_pipe(hidden, seg, params):
    """Mirrors ParallelTransformerLayerPipe.forward(hidden, seg) -> (output, seg).

    The causal mask is generated inside the kernel (as in generate_mask); layernorm
    positioning is 'post' and this is not the last layer, so no extra final LN.
    """
    W, P = _pack_params(params)
    x2 = hidden.reshape(B * S, H)            # flat 2-D I/O; (B,S,H) reshape stays in the wrapper

    flops = (2 * (B * S) * H * H3            # fused QKV
             + 2 * B * HEADS * S * S * D * 2  # scores + context
             + 2 * (B * S) * H * H            # output projection
             + 2 * (B * S) * H * FF * 2)      # FF in + out
    transcendentals = B * HEADS * S * S + (B * S) * FF + B * HEADS * S + 2 * (B * S)
    bytes_accessed = (x2.size * 4 + W.size * 2 + P.size * 4 + (B * S) * H * 4)

    out2 = pl.pallas_call(
        transformer_layer_kernel,
        out_shape=jax.ShapeDtypeStruct((B * S, H), jnp.float32),
        grid=(B,),
        in_specs=[
            pl.BlockSpec((S, H), lambda b: (b, 0)),            # per-batch row block
            pl.BlockSpec((W_ROWS, LANES), lambda b: (0, 0)),   # resident packed weights
            pl.BlockSpec((8, LANES), lambda b: (0, 0)),        # resident packed biases/LN params
        ],
        out_specs=pl.BlockSpec((S, H), lambda b: (b, 0)),
        compiler_params=pltpu.CompilerParams(dimension_semantics=("parallel",)),
        cost_estimate=pl.CostEstimate(flops=flops,
                                      transcendentals=transcendentals,
                                      bytes_accessed=bytes_accessed),
    )(x2, W, P)
    return out2.reshape(B, S, H), seg


def reference(hidden, params):
    # Pure-JAX f32 reference reproducing the PyTorch forward semantics.
    (wq, bq, wk, bk, wv, bv, wo, bo,
     g1, be1, w1, b1, w2, b2, g2, be2) = params

    def ln(x, g, b):
        mean = x.mean(-1, keepdims=True)
        cen = x - mean
        std = jnp.sqrt((cen ** 2).sum(-1, keepdims=True) / (x.shape[-1] - 1))
        return g * cen / (std + EPS) + b

    causal = jnp.tril(jnp.ones((S, S), jnp.float32))
    mask = ((1.0 - causal) * -10000.0)[None, None, :, :]                     # (1,1,S,S)

    q = hidden @ wq + bq
    k = hidden @ wk + bk
    v = hidden @ wv + bv
    split = lambda t: t.reshape(B, S, HEADS, D).transpose(0, 2, 1, 3)
    qh, kh, vh = split(q), split(k), split(v)
    scores = jnp.einsum("bhqd,bhkd->bhqk", qh, kh) * SCALE + mask
    probs = jax.nn.softmax(scores, axis=-1)
    ctx = jnp.einsum("bhqk,bhkd->bhqd", probs, vh).transpose(0, 2, 1, 3).reshape(B, S, H)
    attn = ctx @ wo + bo
    inter = ln(attn + hidden, g1, be1)
    ff = _gelu_fast(inter @ w1 + b1) @ w2 + b2
    return ln(ff + inter, g2, be2)


def init_params(key):
    ks = jax.random.split(key, 12)
    dense = lambda k, i, o: (jax.random.normal(k, (i, o), jnp.float32) * 0.02)
    bias = lambda k, o: (jax.random.normal(k, (1, o), jnp.float32) * 0.02)
    wq, wk, wv, wo = (dense(ks[i], H, H) for i in range(4))
    bq, bk, bv, bo = (bias(ks[4 + i], H) for i in range(4))
    w1, b1 = dense(ks[8], H, FF), bias(ks[9], FF)
    w2, b2 = dense(ks[10], FF, H), bias(ks[11], H)
    g1 = jnp.ones((1, H), jnp.float32); be1 = jnp.zeros((1, H), jnp.float32)
    g2 = jnp.ones((1, H), jnp.float32); be2 = jnp.zeros((1, H), jnp.float32)
    return (wq, bq, wk, bk, wv, bv, wo, bo, g1, be1, w1, b1, w2, b2, g2, be2)


if __name__ == "__main__":
    key = jax.random.PRNGKey(0)
    k_h, k_p = jax.random.split(key)
    hidden = jax.random.normal(k_h, (B, S, H), jnp.float32)
    seg = jnp.ones((B, S), jnp.int32)   # passed through untouched, as in the Pipe module
    params = init_params(k_p)

    # TODO(synk): nn.Dropout has no in-kernel equivalent; modeled as identity (p=0 / eval).
    out, seg_out = parallel_transformer_layer_pipe(hidden, seg, params)
    out = jax.block_until_ready(out)

    ref = reference(hidden, params)
    assert out.shape == (B, S, H)
    assert seg_out.shape == seg.shape
    # tolerance covers bf16 matmul operands (f32 accumulation) + EUP approx reciprocals
    assert jnp.allclose(out, ref, atol=2e-2, rtol=2e-2), "mismatch vs reference"
    print("KERNEL_OK")
</pallas_src>

<mosaic_0001>
module attributes {stable_mosaic.version = 11 : i64} {
  func.func @transformer_layer_kernel(%arg0: i32, %arg1: memref<8x32xf32, #tpu.memory_space<vmem>>, %arg2: memref<160x128xbf16, #tpu.memory_space<vmem>>, %arg3: memref<8x128xf32, #tpu.memory_space<vmem>>, %arg4: memref<8x32xf32, #tpu.memory_space<vmem>>) attributes {dimension_semantics = [#tpu.dimension_semantics<parallel>], iteration_bounds = array<i64: 2>, scalar_prefetch = 0 : i64, scratch_operands = 0 : i64, tpu.core_type = #tpu.core_type<tc>, window_params = [{transform_indices = @transform_0, window_bounds = array<i64: 8, 32>}, {pipeline_mode = #tpu.pipeline_mode<synchronous>, transform_indices = @transform_1, window_bounds = array<i64: 160, 128>}, {pipeline_mode = #tpu.pipeline_mode<synchronous>, transform_indices = @transform_2, window_bounds = array<i64: 8, 128>}, {transform_indices = @transform_3, window_bounds = array<i64: 8, 32>}]} {
    %c0 = arith.constant 0 : index
    %c0_0 = arith.constant 0 : index
    %0 = vector.load %arg1[%c0, %c0_0] : memref<8x32xf32, #tpu.memory_space<vmem>>, vector<8x32xf32>
    %1 = arith.truncf %0 : vector<8x32xf32> to vector<8x32xbf16>
    %c0_1 = arith.constant 0 : index
    %c0_2 = arith.constant 0 : index
    %2 = vector.load %arg2[%c0_1, %c0_2] : memref<160x128xbf16, #tpu.memory_space<vmem>>, vector<32x128xbf16>
    %c32 = arith.constant 32 : index
    %c0_3 = arith.constant 0 : index
    %3 = vector.load %arg2[%c32, %c0_3] : memref<160x128xbf16, #tpu.memory_space<vmem>>, vector<32x128xbf16>
    %c64 = arith.constant 64 : index
    %c0_4 = arith.constant 0 : index
    %4 = vector.load %arg2[%c64, %c0_4] : memref<160x128xbf16, #tpu.memory_space<vmem>>, vector<32x128xbf16>
    %c96 = arith.constant 96 : index
    %c0_5 = arith.constant 0 : index
    %5 = vector.load %arg2[%c96, %c0_5] : memref<160x128xbf16, #tpu.memory_space<vmem>>, vector<64x128xbf16>
    %c0_6 = arith.constant 0 : index
    %c0_7 = arith.constant 0 : index
    %6 = vector.load %arg3[%c0_6, %c0_7] : memref<8x128xf32, #tpu.memory_space<vmem>>, vector<8x128xf32>
    %7 = vector.extract_strided_slice %6 {offsets = [0, 0], sizes = [1, 128], strides = [1, 1]} : vector<8x128xf32> to vector<1x128xf32>
    %8 = vector.extract_strided_slice %6 {offsets = [1, 0], sizes = [1, 32], strides = [1, 1]} : vector<8x128xf32> to vector<1x32xf32>
    %9 = vector.extract_strided_slice %6 {offsets = [2, 0], sizes = [1, 64], strides = [1, 1]} : vector<8x128xf32> to vector<1x64xf32>
    %10 = vector.extract_strided_slice %6 {offsets = [3, 0], sizes = [1, 32], strides = [1, 1]} : vector<8x128xf32> to vector<1x32xf32>
    %11 = vector.extract_strided_slice %6 {offsets = [4, 0], sizes = [1, 32], strides = [1, 1]} : vector<8x128xf32> to vector<1x32xf32>
    %12 = vector.extract_strided_slice %6 {offsets = [5, 0], sizes = [1, 32], strides = [1, 1]} : vector<8x128xf32> to vector<1x32xf32>
    %13 = vector.extract_strided_slice %6 {offsets = [6, 0], sizes = [1, 32], strides = [1, 1]} : vector<8x128xf32> to vector<1x32xf32>
    %14 = vector.extract_strided_slice %6 {offsets = [7, 0], sizes = [1, 32], strides = [1, 1]} : vector<8x128xf32> to vector<1x32xf32>
    %cst = arith.constant dense<0.000000e+00> : vector<8x128xf32>
    %15 = tpu.matmul %1, %2, %cst {dimension_numbers = #tpu.dot_dimension_numbers<[1], [0], [0], [1], [0, 0, 1, 1], [], []>} : vector<8x32xbf16>, vector<32x128xbf16>, vector<8x128xf32> -> vector<8x128xf32>
    %16 = vector.broadcast %7 : vector<1x128xf32> to vector<8x128xf32>
    %17 = arith.addf %15, %16 : vector<8x128xf32>
    %18 = tpu.iota {dimensions = array<i32: 0>} : vector<8x8xi32>
    %19 = tpu.iota {dimensions = array<i32: 1>} : vector<8x8xi32>
    %20 = arith.cmpi sge, %18, %19 : vector<8x8xi32>
    %cst_8 = arith.constant 0.000000e+00 : f32
    %cst_9 = arith.constant -1.000000e+04 : f32
    %21 = vector.broadcast %cst_8 : f32 to vector<8x8xf32>
    %22 = vector.broadcast %cst_9 : f32 to vector<8x8xf32>
    %23 = arith.select %20, %21, %22 : vector<8x8xi1>, vector<8x8xf32>
    %24 = tpu.transpose %17, [1, 0] : vector<8x128xf32> -> vector<128x8xf32>
    %25 = vector.extract_strided_slice %24 {offsets = [0, 0], sizes = [96, 8], strides = [1, 1]} : vector<128x8xf32> to vector<96x8xf32>
    %26 = vector.shape_cast %25 : vector<96x8xf32> to vector<3x4x8x8xf32>
    %27 = vector.extract_strided_slice %26 {offsets = [0, 0, 0, 0], sizes = [1, 4, 8, 8], strides = [1, 1, 1, 1]} : vector<3x4x8x8xf32> to vector<1x4x8x8xf32>
    %28 = vector.shape_cast %27 : vector<1x4x8x8xf32> to vector<4x8x8xf32>
    %29 = vector.extract_strided_slice %26 {offsets = [1, 0, 0, 0], sizes = [1, 4, 8, 8], strides = [1, 1, 1, 1]} : vector<3x4x8x8xf32> to vector<1x4x8x8xf32>
    %30 = vector.shape_cast %29 : vector<1x4x8x8xf32> to vector<4x8x8xf32>
    %31 = vector.extract_strided_slice %26 {offsets = [2, 0, 0, 0], sizes = [1, 4, 8, 8], strides = [1, 1, 1, 1]} : vector<3x4x8x8xf32> to vector<1x4x8x8xf32>
    %32 = vector.shape_cast %31 : vector<1x4x8x8xf32> to vector<4x8x8xf32>
    "tpu.trace_start"() <{level = 10 : i32, message = "hds,hdt->hst"}> : () -> ()
    %cst_10 = arith.constant dense<0.000000e+00> : vector<4x8x8xf32>
    %33 = tpu.matmul %28, %30, %cst_10 {dimension_numbers = #tpu.dot_dimension_numbers<[1], [1], [2], [2], [0, 0, 0, 2, 1, 2], [0], [0]>} : vector<4x8x8xf32>, vector<4x8x8xf32>, vector<4x8x8xf32> -> vector<4x8x8xf32>
    "tpu.trace_stop"() : () -> ()
    %34 = vector.shape_cast %23 : vector<8x8xf32> to vector<1x8x8xf32>
    %35 = vector.broadcast %34 : vector<1x8x8xf32> to vector<4x8x8xf32>
    %36 = arith.addf %33, %35 : vector<4x8x8xf32>
    %cst_11 = arith.constant dense<0xFF800000> : vector<4x8xf32>
    %37 = vector.multi_reduction <maximumf>, %36, %cst_11 [2] : vector<4x8x8xf32> to vector<4x8xf32>
    %38 = vector.shape_cast %37 : vector<4x8xf32> to vector<4x8x1xf32>
    %39 = vector.broadcast %38 : vector<4x8x1xf32> to vector<4x8x8xf32>
    %40 = arith.subf %36, %39 : vector<4x8x8xf32>
    %41 = math.exp %40 : vector<4x8x8xf32>
    %cst_12 = arith.constant dense<0.000000e+00> : vector<4x8xf32>
    %42 = vector.multi_reduction <add>, %41, %cst_12 [2] : vector<4x8x8xf32> to vector<4x8xf32>
    %43 = vector.shape_cast %42 : vector<4x8xf32> to vector<4x8x1xf32>
    %44 = tpu.reciprocal %43 {approx = true} : vector<4x8x1xf32> -> vector<4x8x1xf32>
    %45 = vector.broadcast %44 : vector<4x8x1xf32> to vector<4x8x8xf32>
    %46 = arith.mulf %41, %45 : vector<4x8x8xf32>
    "tpu.trace_start"() <{level = 10 : i32, message = "hst,hdt->hds"}> : () -> ()
    %cst_13 = arith.constant dense<0.000000e+00> : vector<4x8x8xf32>
    %47 = tpu.matmul %32, %46, %cst_13 {dimension_numbers = #tpu.dot_dimension_numbers<[2], [2], [1], [1], [0, 0, 0, 1, 1, 1], [0], [0]>} : vector<4x8x8xf32>, vector<4x8x8xf32>, vector<4x8x8xf32> -> vector<4x8x8xf32>
    "tpu.trace_stop"() : () -> ()
    %48 = vector.shape_cast %47 : vector<4x8x8xf32> to vector<32x8xf32>
    %49 = tpu.transpose %48, [1, 0] : vector<32x8xf32> -> vector<8x32xf32>
    %50 = arith.truncf %49 : vector<8x32xf32> to vector<8x32xbf16>
    %cst_14 = arith.constant dense<0.000000e+00> : vector<8x128xf32>
    %51 = tpu.matmul %50, %3, %cst_14 {dimension_numbers = #tpu.dot_dimension_numbers<[1], [0], [0], [1], [0, 0, 1, 1], [], []>} : vector<8x32xbf16>, vector<32x128xbf16>, vector<8x128xf32> -> vector<8x128xf32>
    %52 = vector.extract_strided_slice %51 {offsets = [0, 0], sizes = [8, 32], strides = [1, 1]} : vector<8x128xf32> to vector<8x32xf32>
    %53 = vector.broadcast %8 : vector<1x32xf32> to vector<8x32xf32>
    %54 = arith.addf %52, %53 : vector<8x32xf32>
    %55 = arith.addf %54, %0 : vector<8x32xf32>
    %cst_15 = arith.constant dense<0.000000e+00> : vector<8xf32>
    %56 = vector.multi_reduction <add>, %55, %cst_15 [1] : vector<8x32xf32> to vector<8xf32>
    %57 = vector.shape_cast %56 : vector<8xf32> to vector<8x1xf32>
    %cst_16 = arith.constant 3.200000e+01 : f32
    %58 = vector.broadcast %cst_16 : f32 to vector<8x1xf32>
    %59 = arith.divf %57, %58 : vector<8x1xf32>
    %60 = vector.broadcast %59 : vector<8x1xf32> to vector<8x32xf32>
    %61 = arith.subf %55, %60 : vector<8x32xf32>
    %62 = arith.mulf %61, %61 : vector<8x32xf32>
    %cst_17 = arith.constant dense<0.000000e+00> : vector<8xf32>
    %63 = vector.multi_reduction <add>, %62, %cst_17 [1] : vector<8x32xf32> to vector<8xf32>
    %64 = vector.shape_cast %63 : vector<8xf32> to vector<8x1xf32>
    %cst_18 = arith.constant 0.0322580636 : f32
    %65 = vector.broadcast %cst_18 : f32 to vector<8x1xf32>
    %66 = arith.mulf %64, %65 : vector<8x1xf32>
    %67 = math.sqrt %66 : vector<8x1xf32>
    %cst_19 = arith.constant 9.99999997E-7 : f32
    %68 = vector.broadcast %cst_19 : f32 to vector<8x1xf32>
    %69 = arith.addf %67, %68 : vector<8x1xf32>
    %70 = tpu.reciprocal %69 {approx = true} : vector<8x1xf32> -> vector<8x1xf32>
    %71 = vector.broadcast %70 : vector<8x1xf32> to vector<8x32xf32>
    %72 = arith.mulf %61, %71 : vector<8x32xf32>
    %73 = vector.broadcast %11 : vector<1x32xf32> to vector<8x32xf32>
    %74 = arith.mulf %73, %72 : vector<8x32xf32>
    %75 = vector.broadcast %12 : vector<1x32xf32> to vector<8x32xf32>
    %76 = arith.addf %74, %75 : vector<8x32xf32>
    %77 = arith.truncf %76 : vector<8x32xf32> to vector<8x32xbf16>
    %cst_20 = arith.constant dense<0.000000e+00> : vector<8x128xf32>
    %78 = tpu.matmul %77, %4, %cst_20 {dimension_numbers = #tpu.dot_dimension_numbers<[1], [0], [0], [1], [0, 0, 1, 1], [], []>} : vector<8x32xbf16>, vector<32x128xbf16>, vector<8x128xf32> -> vector<8x128xf32>
    %79 = vector.extract_strided_slice %78 {offsets = [0, 0], sizes = [8, 64], strides = [1, 1]} : vector<8x128xf32> to vector<8x64xf32>
    %80 = vector.broadcast %9 : vector<1x64xf32> to vector<8x64xf32>
    %81 = arith.addf %79, %80 : vector<8x64xf32>
    %cst_21 = arith.constant 5.000000e-01 : f32
    %82 = vector.broadcast %cst_21 : f32 to vector<8x64xf32>
    %83 = arith.mulf %82, %81 : vector<8x64xf32>
    %cst_22 = arith.constant 0.797884583 : f32
    %84 = vector.broadcast %cst_22 : f32 to vector<8x64xf32>
    %85 = arith.mulf %84, %81 : vector<8x64xf32>
    %cst_23 = arith.constant 4.471500e-02 : f32
    %86 = vector.broadcast %cst_23 : f32 to vector<8x64xf32>
    %87 = arith.mulf %86, %81 : vector<8x64xf32>
    %88 = arith.mulf %87, %81 : vector<8x64xf32>
    %cst_24 = arith.constant 1.000000e+00 : f32
    %89 = vector.broadcast %cst_24 : f32 to vector<8x64xf32>
    %90 = arith.addf %89, %88 : vector<8x64xf32>
    %91 = arith.mulf %85, %90 : vector<8x64xf32>
    %92 = math.tanh %91 : vector<8x64xf32>
    %cst_25 = arith.constant 1.000000e+00 : f32
    %93 = vector.broadcast %cst_25 : f32 to vector<8x64xf32>
    %94 = arith.addf %93, %92 : vector<8x64xf32>
    %95 = arith.mulf %83, %94 : vector<8x64xf32>
    %96 = arith.truncf %95 : vector<8x64xf32> to vector<8x64xbf16>
    %cst_26 = arith.constant dense<0.000000e+00> : vector<8x128xf32>
    %97 = tpu.matmul %96, %5, %cst_26 {dimension_numbers = #tpu.dot_dimension_numbers<[1], [0], [0], [1], [0, 0, 1, 1], [], []>} : vector<8x64xbf16>, vector<64x128xbf16>, vector<8x128xf32> -> vector<8x128xf32>
    %98 = vector.extract_strided_slice %97 {offsets = [0, 0], sizes = [8, 32], strides = [1, 1]} : vector<8x128xf32> to vector<8x32xf32>
    %99 = vector.broadcast %10 : vector<1x32xf32> to vector<8x32xf32>
    %100 = arith.addf %98, %99 : vector<8x32xf32>
    %101 = arith.addf %100, %76 : vector<8x32xf32>
    %cst_27 = arith.constant dense<0.000000e+00> : vector<8xf32>
    %102 = vector.multi_reduction <add>, %101, %cst_27 [1] : vector<8x32xf32> to vector<8xf32>
    %103 = vector.shape_cast %102 : vector<8xf32> to vector<8x1xf32>
    %cst_28 = arith.constant 3.200000e+01 : f32
    %104 = vector.broadcast %cst_28 : f32 to vector<8x1xf32>
    %105 = arith.divf %103, %104 : vector<8x1xf32>
    %106 = vector.broadcast %105 : vector<8x1xf32> to vector<8x32xf32>
    %107 = arith.subf %101, %106 : vector<8x32xf32>
    %108 = arith.mulf %107, %107 : vector<8x32xf32>
    %cst_29 = arith.constant dense<0.000000e+00> : vector<8xf32>
    %109 = vector.multi_reduction <add>, %108, %cst_29 [1] : vector<8x32xf32> to vector<8xf32>
    %110 = vector.shape_cast %109 : vector<8xf32> to vector<8x1xf32>
    %cst_30 = arith.constant 0.0322580636 : f32
    %111 = vector.broadcast %cst_30 : f32 to vector<8x1xf32>
    %112 = arith.mulf %110, %111 : vector<8x1xf32>
    %113 = math.sqrt %112 : vector<8x1xf32>
    %cst_31 = arith.constant 9.99999997E-7 : f32
    %114 = vector.broadcast %cst_31 : f32 to vector<8x1xf32>
    %115 = arith.addf %113, %114 : vector<8x1xf32>
    %116 = tpu.reciprocal %115 {approx = true} : vector<8x1xf32> -> vector<8x1xf32>
    %117 = vector.broadcast %116 : vector<8x1xf32> to vector<8x32xf32>
    %118 = arith.mulf %107, %117 : vector<8x32xf32>
    %119 = vector.broadcast %13 : vector<1x32xf32> to vector<8x32xf32>
    %120 = arith.mulf %119, %118 : vector<8x32xf32>
    %121 = vector.broadcast %14 : vector<1x32xf32> to vector<8x32xf32>
    %122 = arith.addf %120, %121 : vector<8x32xf32>
    %c0_32 = arith.constant 0 : index
    %c0_33 = arith.constant 0 : index
    %123 = vector.load %arg4[%c0_32, %c0_33] : memref<8x32xf32, #tpu.memory_space<vmem>>, vector<8x32xf32>
    tpu.vector_store %arg4[%c0_32, %c0_33], %122 {strides = array<i32>} : memref<8x32xf32, #tpu.memory_space<vmem>>, vector<8x32xf32>,
    return
  }
  func.func @transform_0(%arg0: i32) -> (i32, i32) {
    %c0_i32 = arith.constant 0 : i32
    %c0_i32_0 = arith.constant 0 : i32
    return %arg0, %c0_i32 : i32, i32
  }
  func.func @transform_1(%arg0: i32) -> (i32, i32) {
    %c0_i32 = arith.constant 0 : i32
    %c0_i32_0 = arith.constant 0 : i32
    %c0_i32_1 = arith.constant 0 : i32
    return %c0_i32, %c0_i32_0 : i32, i32
  }
  func.func @transform_2(%arg0: i32) -> (i32, i32) {
    %c0_i32 = arith.constant 0 : i32
    %c0_i32_0 = arith.constant 0 : i32
    %c0_i32_1 = arith.constant 0 : i32
    return %c0_i32, %c0_i32_0 : i32, i32
  }
  func.func @transform_3(%arg0: i32) -> (i32, i32) {
    %c0_i32 = arith.constant 0 : i32
    %c0_i32_0 = arith.constant 0 : i32
    return %arg0, %c0_i32 : i32, i32
  }
}

</mosaic_0001>

<llo_original>
// kernel: tpu_custom_call.1
$region0: #{tpu_custom_call.1}
  #allocation0 [shape = 'u32[]', space=smem, size = 0x4, offset = 0x4, fixed_abs, tag = 'smem constant byte address 0x4 - core index']
  #allocation1 [shape = 'u32[72,128]{1,0:T(1,128)}', space=vmem, size = 0x9000, scoped, tag = 'internal scratch']
  %s0 = inlined_call_operand.hbm [shape: f32[16,32], index: 0, kind: input, shape index: {}]
  %s1 = inlined_call_operand.hbm [shape: bf16[160,128], index: 1, kind: input, shape index: {}]
  %s2 = inlined_call_operand.hbm [shape: f32[8,128], index: 2, kind: input, shape index: {}]
  %s3 = inlined_call_operand.hbm [shape: f32[16,32], index: 3, kind: output, shape index: {}]
  %s4 = sld [smem:[#allocation0]]
  $region57: #{tpu_custom_call.1} parent=0
    _
  %s6 = ssub.s32 1, %s4
  %s7 = scalar_select 0, %s6, %s4
  $region1: #{tpu_custom_call.1} parent=0
    #allocation2 [shape = 'u8[8192]{0}', space=vmem, size = 0x2000, scoped, tag = 'input window, operand 0']
    #allocation3 [shape = 's32[2]{0}', space=sflag, size = 0x8, scoped, tag = 'scoped memory for tpu_custom_call.1']
    #allocation4 [shape = 's32[2]{0}', space=sflag, size = 0x8, scoped, tag = 'scoped memory for tpu_custom_call.1']
    #allocation5 [shape = 'u8[40960]{0}', space=vmem, size = 0xa000, scoped, tag = 'input window, operand 1, single buffered']
    #allocation6 [shape = 's32[1]{0}', space=sflag, size = 0x4, scoped, tag = 'scoped memory for tpu_custom_call.1']
    #allocation7 [shape = 'u8[4096]{0}', space=vmem, size = 0x1000, scoped, tag = 'input window, operand 2, single buffered']
    #allocation8 [shape = 'u8[8192]{0}', space=vmem, size = 0x2000, scoped, tag = 'output window, operand 0']
    %8 = vsyncpa [#allocation3], 0
    %s9 = scalar_lea.sflag [#allocation3], 1
    %10 = vsyncpa %s9, 0
    %11 = vsyncpa [#allocation6], 0
    %12 = vsyncpa [#allocation4], 0
    %s13 = scalar_lea.sflag [#allocation4], 1
    %14 = vsyncpa %s13, 0
    loop: start=0, step=1, limit=4
    $region2: #{tpu_custom_call.1} parent=1 // loop_pre_header
      _
    $region3: #{tpu_custom_call.1} parent=1 // loop_header
      %s16 = sphi 0, %s20
      %p17 = scmp.ge.s32.totalorder %s16, 4
      %s26 = sphi 0, %s28
      %s29 = sphi 0, %s26
      %s30 = sphi 0, %s29
      %s46 = sphi 0, %s30
      %s50 = sphi 0, %s50
      %s52 = sphi 0, %s50
      %s53 = sphi 0, %s52
      %s67 = sphi 0, %s53
      %s71 = sphi 0, %s71
      %s73 = sphi 0, %s71
      %s74 = sphi 0, %s73
      %s88 = sphi 0, %s74
      %s94 = sphi 0, %s96
      %s97 = sphi 0, %s94
      %s98 = sphi 0, %s97
      %s114 = sphi 0, %s98
    $region4: #{tpu_custom_call.1} parent=1 // loop_header_branch
      %19 = sbr.rel (%p17) target = $region8
    $region5: #{tpu_custom_call.1} parent=1 // loop_body
      %s21 = ssub.s32 %s16, 1
      %s22 = ssub.s32 %s16, 2
      %s23 = sadd.s32 %s16, 1
      %s24 = ssub.s32 %s16, %s23
      %p25 = scmp.eq.s32.totalorder %s24, 0
      %s27 = sadd.s32 %s26, 1
      %s28 = scalar_select %p25, %s26, %s27
      %p31 = pneg %p25
      %p32 = scmp.eq.s32.totalorder %s16, 1
      %p33 = por %p31, %p32
      %p34 = scmp.ne.s32.totalorder %s26, %s29
      %p35 = scmp.eq.s32.totalorder %s16, 0
      %p36 = por %p34, %p35
      %p37 = scmp.ne.s32.totalorder %s26, %s29
      %p38 = scmp.eq.s32.totalorder %s21, 1
      %p39 = por %p37, %p38
      %p40 = scmp.ne.s32.totalorder %s29, %s30
      %p41 = scmp.eq.s32.totalorder %s21, 0
      %p42 = por %p40, %p41
      %p43 = scmp.ne.s32.totalorder %s29, %s30
      %p44 = scmp.eq.s32.totalorder %s22, 1
      %p45 = por %p43, %p44
      %p47 = scmp.ne.s32.totalorder %s30, %s46
      %p48 = scmp.eq.s32.totalorder %s22, 0
      %p49 = por %p47, %p48
      %s51 = sadd.s32 %s50, 1
      %p54 = scmp.eq.s32.totalorder %s16, 1
      %p55 = scmp.ne.s32.totalorder %s50, %s52
      %p56 = scmp.eq.s32.totalorder %s16, 0
      %p57 = por %p55, %p56
      %p58 = scmp.ne.s32.totalorder %s50, %s52
      %p59 = scmp.eq.s32.totalorder %s21, 1
      %p60 = por %p58, %p59
      %p61 = scmp.ne.s32.totalorder %s52, %s53
      %p62 = scmp.eq.s32.totalorder %s21, 0
      %p63 = por %p61, %p62
      %p64 = scmp.ne.s32.totalorder %s52, %s53
      %p65 = scmp.eq.s32.totalorder %s22, 1
      %p66 = por %p64, %p65
      %p68 = scmp.ne.s32.totalorder %s53, %s67
      %p69 = scmp.eq.s32.totalorder %s22, 0
      %p70 = por %p68, %p69
      %s72 = sadd.s32 %s71, 1
      %p75 = scmp.eq.s32.totalorder %s16, 1
      %p76 = scmp.ne.s32.totalorder %s71, %s73
      %p77 = scmp.eq.s32.totalorder %s16, 0
      %p78 = por %p76, %p77
      %p79 = scmp.ne.s32.totalorder %s71, %s73
      %p80 = scmp.eq.s32.totalorder %s21, 1
      %p81 = por %p79, %p80
      %p82 = scmp.ne.s32.totalorder %s73, %s74
      %p83 = scmp.eq.s32.totalorder %s21, 0
      %p84 = por %p82, %p83
      %p85 = scmp.ne.s32.totalorder %s73, %s74
      %p86 = scmp.eq.s32.totalorder %s22, 1
      %p87 = por %p85, %p86
      %p89 = scmp.ne.s32.totalorder %s74, %s88
      %p90 = scmp.eq.s32.totalorder %s22, 0
      %p91 = por %p89, %p90
      %s92 = ssub.s32 %s16, %s23
      %p93 = scmp.eq.s32.totalorder %s92, 0
      %s95 = sadd.s32 %s94, 1
      %s96 = scalar_select %p93, %s94, %s95
      %p99 = pneg %p93
      %p100 = scmp.eq.s32.totalorder %s16, 1
      %p101 = por %p99, %p100
      %p102 = scmp.ne.s32.totalorder %s94, %s97
      %p103 = scmp.eq.s32.totalorder %s16, 0
      %p104 = por %p102, %p103
      %p105 = scmp.ne.s32.totalorder %s94, %s97
      %p106 = scmp.eq.s32.totalorder %s21, 1
      %p107 = por %p105, %p106
      %p108 = scmp.ne.s32.totalorder %s97, %s98
      %p109 = scmp.eq.s32.totalorder %s21, 0
      %p110 = por %p108, %p109
      %p111 = scmp.ne.s32.totalorder %s97, %s98
      %p112 = scmp.eq.s32.totalorder %s22, 1
      %p113 = por %p111, %p112
      %p115 = scmp.ne.s32.totalorder %s98, %s114
      %p116 = scmp.eq.s32.totalorder %s22, 0
      %p117 = por %p115, %p116
      %p118 = scmp.le.s32.totalorder 1, %s16
      %p119 = scmp.lt.s32.totalorder %s16, 3
      %p120 = pnand %p118, %p119
      %p121 = pneg %p120
      // Predicated region
      $region9: #{tpu_custom_call.1} parent=5 // pred_check
        _
      $region10: #{tpu_custom_call.1} parent=5 // pred_check_branch
        %123 = sbr.rel (%p120) target = $region12
      $region11: #{tpu_custom_call.1} parent=5 // pred_region
        %s124 = ssub.s32 %s16, 1
        // Predicated region
        $region13: #{tpu_custom_call.1} parent=11 // pred_check
          %p125 = pneg %p63
        $region14: #{tpu_custom_call.1} parent=11 // pred_check_branch
          %127 = sbr.rel (%p125) target = $region16
        $region15: #{tpu_custom_call.1} parent=11 // pred_region
          %129 = vsyncadd [#allocation6], 0
          %s130 = sshll.u32 %s1, 4
          %s131 = int_to_ptr.hbm [resolvable:$true] %s130
          %s132 = sshll.u32 [#allocation5], 4
          %s133 = int_to_ptr.vmem [resolvable:$true] %s132
          %138 = dma.hbm_to_vmem [thread:$0]  %s131, 1280, %s133, [#allocation6], 64, 64, 4
        $region16: #{tpu_custom_call.1} parent=11 // pred_fallthru
          _
        // Predicated region
        $region17: #{tpu_custom_call.1} parent=11 // pred_check
          %p139 = pneg %p84
        $region18: #{tpu_custom_call.1} parent=11 // pred_check_branch
          %141 = sbr.rel (%p139) target = $region20
        $region19: #{tpu_custom_call.1} parent=11 // pred_region
          %143 = vsyncadd [#allocation6], 0
          %s145 = sshll.u32 %s2, 4
          %s146 = int_to_ptr.hbm [resolvable:$true] %s145
          %s147 = sshll.u32 [#allocation7], 4
          %s148 = int_to_ptr.vmem [resolvable:$true] %s147
          %150 = dma.hbm_to_vmem [thread:$0]  %s146, 128, %s148, [#allocation6]
        $region20: #{tpu_custom_call.1} parent=11 // pred_fallthru
          _
      $region12: #{tpu_custom_call.1} parent=5 // pred_fallthru
        _
      %p151 = scmp.lt.s32.totalorder %s16, 2
      // Predicated region
      $region21: #{tpu_custom_call.1} parent=5 // pred_check
        %p152 = pneg %p151
      $region22: #{tpu_custom_call.1} parent=5 // pred_check_branch
        %154 = sbr.rel (%p152) target = $region24
      $region23: #{tpu_custom_call.1} parent=5 // pred_region
        // Predicated region
        $region25: #{tpu_custom_call.1} parent=23 // pred_check
          %p155 = pneg %p36
        $region26: #{tpu_custom_call.1} parent=23 // pred_check_branch
          %157 = sbr.rel (%p155) target = $region28
        $region27: #{tpu_custom_call.1} parent=23 // pred_region
          %s158 = sand.u32 %s26, 1
          %s159 = scalar_lea.sflag [#allocation3], %s158
          %s160 = sand.u32 %s26, 1
          %s161 = smul.addr %s160, 8
          %s162 = scalar_lea.vmem [#allocation2], %s161
          %164 = vsyncadd %s159, 0
          %s165 = smul.addr %s16, 8
          %s166 = scalar_lea.hbm %s0, %s165
          %s168 = sshll.u32 %s166, 4
          %s169 = int_to_ptr.hbm [resolvable:$true] %s168
          %s170 = sshll.u32 %s162, 4
          %s171 = int_to_ptr.vmem [resolvable:$true] %s170
          %173 = dma.hbm_to_vmem [thread:$0]  %s169, 128, %s171, %s159
        $region28: #{tpu_custom_call.1} parent=23 // pred_fallthru
          _
      $region24: #{tpu_custom_call.1} parent=5 // pred_fallthru
        _
      %p174 = scmp.le.s32.totalorder 1, %s16
      %p175 = scmp.lt.s32.totalorder %s16, 3
      %p176 = pnand %p174, %p175
      %p177 = pneg %p176
      // Predicated region
      $region29: #{tpu_custom_call.1} parent=5 // pred_check
        _
      $region30: #{tpu_custom_call.1} parent=5 // pred_check_branch
        %179 = sbr.rel (%p176) target = $region32
      $region31: #{tpu_custom_call.1} parent=5 // pred_region
        %s180 = ssub.s32 %s16, 1
        %s181 = sand.u32 %s29, 1
        %s182 = scalar_lea.sflag [#allocation3], %s181
        %s183 = sand.u32 %s29, 1
        %s184 = smul.addr %s183, 8
        %s185 = scalar_lea.vmem [#allocation2], %s184
        // Predicated region
        $region33: #{tpu_custom_call.1} parent=31 // pred_check
          %p186 = pneg %p42
        $region34: #{tpu_custom_call.1} parent=31 // pred_check_branch
          %188 = sbr.rel (%p186) target = $region36
        $region35: #{tpu_custom_call.1} parent=31 // pred_region
          %190 = dma.done %s182, 128
        $region36: #{tpu_custom_call.1} parent=31 // pred_fallthru
          _
        // Predicated region
        $region37: #{tpu_custom_call.1} parent=31 // pred_check
          %p191 = pneg %p63
        $region38: #{tpu_custom_call.1} parent=31 // pred_check_branch
          %193 = sbr.rel (%p191) target = $region40
        $region39: #{tpu_custom_call.1} parent=31 // pred_region
          %195 = dma.done [#allocation6], 1280
        $region40: #{tpu_custom_call.1} parent=31 // pred_fallthru
          _
        // Predicated region
        $region41: #{tpu_custom_call.1} parent=31 // pred_check
          %p196 = pneg %p84
        $region42: #{tpu_custom_call.1} parent=31 // pred_check_branch
          %198 = sbr.rel (%p196) target = $region44
        $region43: #{tpu_custom_call.1} parent=31 // pred_region
          %200 = dma.done [#allocation6], 128
        $region44: #{tpu_custom_call.1} parent=31 // pred_fallthru
          _
        %s201 = sand.u32 %s29, 1
        %s202 = scalar_lea.sflag [#allocation3], %s201
        %s203 = sand.u32 %s29, 1
        %s204 = smul.addr %s203, 8
        %s205 = scalar_lea.vmem [#allocation2], %s204
        %p206 = pneg %p42
        %p207 = pneg %p39
        %p208 = pneg %p63
        %p209 = pneg %p60
        %p210 = pneg %p84
        %p211 = pneg %p81
        %p212 = pneg %p110
        %p213 = pneg %p107
        %s214 = sand.u32 %s97, 1
        %s215 = scalar_lea.sflag [#allocation4], %s214
        %s216 = sand.u32 %s97, 1
        %s217 = smul.addr %s216, 8
        %s218 = scalar_lea.vmem [#allocation8], %s217
        %v220 = vld [vmem:[%s185] sm:$0xff]
        %v221 = vpack.c.bf16 %v220, %v220
        %v222 = vld [vmem:[#allocation5] sm:$0xf]
        %v223 = vld [vmem:[#allocation5 + $0x4] sm:$0xf]
        %v224 = vld [vmem:[#allocation5 + $0x8] sm:$0xf]
        %v225 = vld [vmem:[#allocation5 + $0xc] sm:$0xf]
        %v226 = vld [vmem:[#allocation5 + $0x10] sm:$0xf]
        %v227 = vld [vmem:[#allocation5 + $0x14] sm:$0xf]
        %v228 = vld [vmem:[#allocation5 + $0x18] sm:$0xf]
        %v229 = vld [vmem:[#allocation5 + $0x1c] sm:$0xf]
        %v230 = vld [vmem:[#allocation5 + $0x20] sm:$0xf]
        %v231 = vld [vmem:[#allocation5 + $0x24] sm:$0xf]
        %v232 = vld [vmem:[#allocation5 + $0x28] sm:$0xf]
        %v233 = vld [vmem:[#allocation5 + $0x2c] sm:$0xf]
        %v234 = vld [vmem:[#allocation5 + $0x30] sm:$0xf]
        %v235 = vld [vmem:[#allocation5 + $0x34] sm:$0xf]
        %v236 = vld [vmem:[#allocation5 + $0x38] sm:$0xf]
        %v237 = vld [vmem:[#allocation5 + $0x3c] sm:$0xf]
        %v238 = vld [vmem:[#allocation5 + $0x40] sm:$0xf]
        %v239 = vld [vmem:[#allocation5 + $0x44] sm:$0xf]
        %v240 = vld [vmem:[#allocation5 + $0x48] sm:$0xf]
        %v241 = vld [vmem:[#allocation5 + $0x4c] sm:$0xf]
        %v242 = vld [vmem:[#allocation7] sm:$0xff]
        %v243 = vperm.slane %v242, 0
        %v248 = vunpack.c.l.b16 %v222
        %v249 = vunpack.c.l.b16 %v223
        %v250 = vunpack.c.l.b16 %v224
        %v251 = vunpack.c.l.b16 %v225
        %v252 = vpack.c.b16 %v249, %v248
        %v253 = vpack.c.b16 %v251, %v250
        %vm256 = vcmask 261120
        %v258 = vsel %vm256, %v221, 0
        %260 = vmatpush.bf16.msra.mxu0 0
        %261 = vmatpush.bf16.msra.mxu0 0
        %262 = vmatpush.bf16.msra.mxu0 0
        %263 = vmatpush.bf16.msra.mxu0 0
        %264 = vmatpush.bf16.msra.mxu0 0
        %265 = vmatpush.bf16.msra.mxu0 0
        %266 = vmatpush.bf16.msra.mxu0 %v253
        %267 = vmatpush.bf16.msra.mxu0 %v252
        %268 = vmatmul.bf16.gmra.mxu0 %v258
        %v269 = vpop.f32.mrf.mxu0
        %v270 = vadd.f32 %v243, %v269
        %v271 = vpop.f32.mrf.mxu0
        %272 = vdwg.mxu0
        %v273 = vlaneseq
        %v274 = vshrl.u32 %v273, 7
        %v275 = vlaneseq
        %v276 = vand.u32 %v275, 127
        %vm277 = vcmp.ge.s32.totalorder %v274, %v276
        %v278 = vsel %vm277, 0.0, -10000.0
        %279 = vxpose.xlu0.b32.start [1/16] %v270, 128
        %280 = vxpose.xlu0.b32.cont [2/16] 0.0, 128
        %281 = vxpose.xlu0.b32.cont [3/16] 0.0, 128
        %282 = vxpose.xlu0.b32.cont [4/16] 0.0, 128
        %283 = vxpose.xlu0.b32.cont [5/16] 0.0, 128
        %284 = vxpose.xlu0.b32.cont [6/16] 0.0, 128
        %285 = vxpose.xlu0.b32.cont [7/16] 0.0, 128
        %286 = vxpose.xlu0.b32.cont [8/16] 0.0, 128
        %287 = vxpose.xlu0.b32.cont [9/16] 0.0, 128
        %288 = vxpose.xlu0.b32.cont [10/16] 0.0, 128
        %289 = vxpose.xlu0.b32.cont [11/16] 0.0, 128
        %290 = vxpose.xlu0.b32.cont [12/16] 0.0, 128
        %291 = vxpose.xlu0.b32.cont [13/16] 0.0, 128
        %292 = vxpose.xlu0.b32.cont [14/16] 0.0, 128
        %293 = vxpose.xlu0.b32.cont [15/16] 0.0, 128
        %294 = vxpose.xlu0.b32.end [16/16] 0.0, 128
        %v295 = vpop.trf.xlu0
        %v296 = vpop.trf.xlu0
        %v297 = vpop.trf.xlu0
        %v298 = vpop.trf.xlu0
        %v299 = vpop.trf.xlu0
        %v300 = vpop.trf.xlu0
        %v301 = vpop.trf.xlu0
        %v302 = vpop.trf.xlu0
        %v303 = vpop.trf.xlu0
        %v304 = vpop.trf.xlu0
        %v305 = vpop.trf.xlu0
        %v306 = vpop.trf.xlu0
        %v307 = vpop.trf.xlu0
        %v308 = vpop.trf.xlu0
        %v309 = vpop.trf.xlu0
        %v310 = vpop.trf.xlu0
        %311 = vxpose.xlu0.b32.start [1/16] %v295, 128
        %312 = vxpose.xlu0.b32.cont [2/16] 0.0, 128
        %313 = vxpose.xlu0.b32.cont [3/16] 0.0, 128
        %314 = vxpose.xlu0.b32.cont [4/16] 0.0, 128
        %315 = vxpose.xlu0.b32.cont [5/16] 0.0, 128
        %316 = vxpose.xlu0.b32.cont [6/16] 0.0, 128
        %317 = vxpose.xlu0.b32.cont [7/16] 0.0, 128
        %318 = vxpose.xlu0.b32.cont [8/16] 0.0, 128
        %319 = vxpose.xlu0.b32.cont [9/16] 0.0, 128
        %320 = vxpose.xlu0.b32.cont [10/16] 0.0, 128
        %321 = vxpose.xlu0.b32.cont [11/16] 0.0, 128
        %322 = vxpose.xlu0.b32.cont [12/16] 0.0, 128
        %323 = vxpose.xlu0.b32.cont [13/16] 0.0, 128
        %324 = vxpose.xlu0.b32.cont [14/16] 0.0, 128
        %325 = vxpose.xlu0.b32.cont [15/16] 0.0, 128
        %326 = vxpose.xlu0.b32.end [16/16] 0.0, 128
        %v327 = vpop.trf.xlu0
        %v328 = vpop.trf.xlu0
        %v329 = vpop.trf.xlu0
        %v330 = vpop.trf.xlu0
        %v331 = vpop.trf.xlu0
        %v332 = vpop.trf.xlu0
        %v333 = vpop.trf.xlu0
        %v334 = vpop.trf.xlu0
        %v335 = vpop.trf.xlu0
        %v336 = vpop.trf.xlu0
        %v337 = vpop.trf.xlu0
        %v338 = vpop.trf.xlu0
        %v339 = vpop.trf.xlu0
        %v340 = vpop.trf.xlu0
        %v341 = vpop.trf.xlu0
        %v342 = vpop.trf.xlu0
        %vm343 = vcmask 64512
        %v345 = vsel %vm343, %v327, 0
        %347 = vmatpush.msra.mxu0 0.0
        %348 = vmatpush.msra.mxu0 0.0
        %349 = vmatpush.msra.mxu0 0.0
        %350 = vmatpush.msra.mxu0 0.0
        %351 = vmatpush.msra.mxu0 0.0
        %352 = vmatpush.msra.mxu0 0.0
        %353 = vmatpush.msra.mxu0 0.0
        %354 = vmatpush.msra.mxu0 0.0
        %355 = vmatpush.msra.mxu0 0.0
        %356 = vmatpush.msra.mxu0 0.0
        %357 = vmatpush.msra.mxu0 0.0
        %358 = vmatpush.msra.mxu0 0.0
        %359 = vmatpush.msra.mxu0 0.0
        %360 = vmatpush.msra.mxu0 0.0
        %361 = vmatpush.msra.mxu0 0.0
        %362 = vmatpush.msra.mxu0 %v299
        %363 = vmatmul.f32.gmra.mxu0 %v345
        %v364 = vpop.f32.mrf.mxu0
        %v365 = vadd.f32 %v278, %v364
        %366 = vdwg.mxu0
        %367 = vxpose.xlu0.b32.start [1/16] %v296, 128
        %368 = vxpose.xlu0.b32.cont [2/16] 0.0, 128
        %369 = vxpose.xlu0.b32.cont [3/16] 0.0, 128
        %370 = vxpose.xlu0.b32.cont [4/16] 0.0, 128
        %371 = vxpose.xlu0.b32.cont [5/16] 0.0, 128
        %372 = vxpose.xlu0.b32.cont [6/16] 0.0, 128
        %373 = vxpose.xlu0.b32.cont [7/16] 0.0, 128
        %374 = vxpose.xlu0.b32.cont [8/16] 0.0, 128
        %375 = vxpose.xlu0.b32.cont [9/16] 0.0, 128
        %376 = vxpose.xlu0.b32.cont [10/16] 0.0, 128
        %377 = vxpose.xlu0.b32.cont [11/16] 0.0, 128
        %378 = vxpose.xlu0.b32.cont [12/16] 0.0, 128
        %379 = vxpose.xlu0.b32.cont [13/16] 0.0, 128
        %380 = vxpose.xlu0.b32.cont [14/16] 0.0, 128
        %381 = vxpose.xlu0.b32.cont [15/16] 0.0, 128
        %382 = vxpose.xlu0.b32.end [16/16] 0.0, 128
        %v383 = vpop.trf.xlu0
        %v384 = vpop.trf.xlu0
        %v385 = vpop.trf.xlu0
        %v386 = vpop.trf.xlu0
        %v387 = vpop.trf.xlu0
        %v388 = vpop.trf.xlu0
        %v389 = vpop.trf.xlu0
        %v390 = vpop.trf.xlu0
        %v391 = vpop.trf.xlu0
        %v392 = vpop.trf.xlu0
        %v393 = vpop.trf.xlu0
        %v394 = vpop.trf.xlu0
        %v395 = vpop.trf.xlu0
        %v396 = vpop.trf.xlu0
        %v397 = vpop.trf.xlu0
        %v398 = vpop.trf.xlu0
        %v400 = vsel %vm343, %v383, 0
        %402 = vmatpush.msra.mxu0 0.0
        %403 = vmatpush.msra.mxu0 0.0
        %404 = vmatpush.msra.mxu0 0.0
        %405 = vmatpush.msra.mxu0 0.0
        %406 = vmatpush.msra.mxu0 0.0
        %407 = vmatpush.msra.mxu0 0.0
        %408 = vmatpush.msra.mxu0 0.0
        %409 = vmatpush.msra.mxu0 0.0
        %410 = vmatpush.msra.mxu0 0.0
        %411 = vmatpush.msra.mxu0 0.0
        %412 = vmatpush.msra.mxu0 0.0
        %413 = vmatpush.msra.mxu0 0.0
        %414 = vmatpush.msra.mxu0 0.0
        %415 = vmatpush.msra.mxu0 0.0
        %416 = vmatpush.msra.mxu0 0.0
        %417 = vmatpush.msra.mxu0 %v300
        %418 = vmatmul.f32.gmra.mxu0 %v400
        %v419 = vpop.f32.mrf.mxu0
        %v420 = vadd.f32 %v278, %v419
        %421 = vdwg.mxu0
        %422 = vxpose.xlu0.b32.start [1/16] %v297, 128
        %423 = vxpose.xlu0.b32.cont [2/16] 0.0, 128
        %424 = vxpose.xlu0.b32.cont [3/16] 0.0, 128
        %425 = vxpose.xlu0.b32.cont [4/16] 0.0, 128
        %426 = vxpose.xlu0.b32.cont [5/16] 0.0, 128
        %427 = vxpose.xlu0.b32.cont [6/16] 0.0, 128
        %428 = vxpose.xlu0.b32.cont [7/16] 0.0, 128
        %429 = vxpose.xlu0.b32.cont [8/16] 0.0, 128
        %430 = vxpose.xlu0.b32.cont [9/16] 0.0, 128
        %431 = vxpose.xlu0.b32.cont [10/16] 0.0, 128
        %432 = vxpose.xlu0.b32.cont [11/16] 0.0, 128
        %433 = vxpose.xlu0.b32.cont [12/16] 0.0, 128
        %434 = vxpose.xlu0.b32.cont [13/16] 0.0, 128
        %435 = vxpose.xlu0.b32.cont [14/16] 0.0, 128
        %436 = vxpose.xlu0.b32.cont [15/16] 0.0, 128
        %437 = vxpose.xlu0.b32.end [16/16] 0.0, 128
        %v438 = vpop.trf.xlu0
        %v439 = vpop.trf.xlu0
        %v440 = vpop.trf.xlu0
        %v441 = vpop.trf.xlu0
        %v442 = vpop.trf.xlu0
        %v443 = vpop.trf.xlu0
        %v444 = vpop.trf.xlu0
        %v445 = vpop.trf.xlu0
        %v446 = vpop.trf.xlu0
        %v447 = vpop.trf.xlu0
        %v448 = vpop.trf.xlu0
        %v449 = vpop.trf.xlu0
        %v450 = vpop.trf.xlu0
        %v451 = vpop.trf.xlu0
        %v452 = vpop.trf.xlu0
        %v453 = vpop.trf.xlu0
        %v455 = vsel %vm343, %v438, 0
        %457 = vmatpush.msra.mxu0 0.0
        %458 = vmatpush.msra.mxu0 0.0
        %459 = vmatpush.msra.mxu0 0.0
        %460 = vmatpush.msra.mxu0 0.0
        %461 = vmatpush.msra.mxu0 0.0
        %462 = vmatpush.msra.mxu0 0.0
        %463 = vmatpush.msra.mxu0 0.0
        %464 = vmatpush.msra.mxu0 0.0
        %465 = vmatpush.msra.mxu0 0.0
        %466 = vmatpush.msra.mxu0 0.0
        %467 = vmatpush.msra.mxu0 0.0
        %468 = vmatpush.msra.mxu0 0.0
        %469 = vmatpush.msra.mxu0 0.0
        %470 = vmatpush.msra.mxu0 0.0
        %471 = vmatpush.msra.mxu0 0.0
        %472 = vmatpush.msra.mxu0 %v301
        %473 = vmatmul.f32.gmra.mxu0 %v455
        %v474 = vpop.f32.mrf.mxu0
        %v475 = vadd.f32 %v278, %v474
        %476 = vdwg.mxu0
        %477 = vxpose.xlu0.b32.start [1/16] %v298, 128
        %478 = vxpose.xlu0.b32.cont [2/16] 0.0, 128
        %479 = vxpose.xlu0.b32.cont [3/16] 0.0, 128
        %480 = vxpose.xlu0.b32.cont [4/16] 0.0, 128
        %481 = vxpose.xlu0.b32.cont [5/16] 0.0, 128
        %482 = vxpose.xlu0.b32.cont [6/16] 0.0, 128
        %483 = vxpose.xlu0.b32.cont [7/16] 0.0, 128
        %484 = vxpose.xlu0.b32.cont [8/16] 0.0, 128
        %485 = vxpose.xlu0.b32.cont [9/16] 0.0, 128
        %486 = vxpose.xlu0.b32.cont [10/16] 0.0, 128
        %487 = vxpose.xlu0.b32.cont [11/16] 0.0, 128
        %488 = vxpose.xlu0.b32.cont [12/16] 0.0, 128
        %489 = vxpose.xlu0.b32.cont [13/16] 0.0, 128
        %490 = vxpose.xlu0.b32.cont [14/16] 0.0, 128
        %491 = vxpose.xlu0.b32.cont [15/16] 0.0, 128
        %492 = vxpose.xlu0.b32.end [16/16] 0.0, 128
        %v493 = vpop.trf.xlu0
        %v494 = vpop.trf.xlu0
        %v495 = vpop.trf.xlu0
        %v496 = vpop.trf.xlu0
        %v497 = vpop.trf.xlu0
        %v498 = vpop.trf.xlu0
        %v499 = vpop.trf.xlu0
        %v500 = vpop.trf.xlu0
        %v501 = vpop.trf.xlu0
        %v502 = vpop.trf.xlu0
        %v503 = vpop.trf.xlu0
        %v504 = vpop.trf.xlu0
        %v505 = vpop.trf.xlu0
        %v506 = vpop.trf.xlu0
        %v507 = vpop.trf.xlu0
        %v508 = vpop.trf.xlu0
        %v510 = vsel %vm343, %v493, 0
        %512 = vmatpush.msra.mxu0 0.0
        %513 = vmatpush.msra.mxu0 0.0
        %514 = vmatpush.msra.mxu0 0.0
        %515 = vmatpush.msra.mxu0 0.0
        %516 = vmatpush.msra.mxu0 0.0
        %517 = vmatpush.msra.mxu0 0.0
        %518 = vmatpush.msra.mxu0 0.0
        %519 = vmatpush.msra.mxu0 0.0
        %520 = vmatpush.msra.mxu0 0.0
        %521 = vmatpush.msra.mxu0 0.0
        %522 = vmatpush.msra.mxu0 0.0
        %523 = vmatpush.msra.mxu0 0.0
        %524 = vmatpush.msra.mxu0 0.0
        %525 = vmatpush.msra.mxu0 0.0
        %526 = vmatpush.msra.mxu0 0.0
        %527 = vmatpush.msra.mxu0 %v302
        %528 = vmatmul.f32.gmra.mxu0 %v510
        %v529 = vpop.f32.mrf.mxu0
        %v530 = vadd.f32 %v278, %v529
        %531 = vdwg.mxu0
        %v532 = vsel %vm343, %v365, -inf
        %533 = vmax.xlane.f32.xlu0 %v532
        %v534 = vpop.xlane.xlu0 %533
        %v535 = vsel %vm343, %v420, -inf
        %536 = vmax.xlane.f32.xlu0 %v535
        %v537 = vpop.xlane.xlu0 %536
        %v538 = vsel %vm343, %v475, -inf
        %539 = vmax.xlane.f32.xlu0 %v538
        %v540 = vpop.xlane.xlu0 %539
        %v541 = vsel %vm343, %v530, -inf
        %542 = vmax.xlane.f32.xlu0 %v541
        %v543 = vpop.xlane.xlu0 %542
        %v544 = vsub.f32 %v365, %v534
        %v545 = vsub.f32 %v420, %v537
        %v546 = vsub.f32 %v475, %v540
        %v547 = vsub.f32 %v530, %v543
        %v548 = vmul.f32 %v544, 1.442695
        %v549 = vpow.pop %v548
        %v550 = vmul.f32 %v545, 1.442695
        %v551 = vpow.pop %v550
        %v552 = vmul.f32 %v546, 1.442695
        %v553 = vpow.pop %v552
        %v554 = vmul.f32 %v547, 1.442695
        %v555 = vpow.pop %v554
        %v556 = vsel %vm343, %v549, 0.0
        %557 = vadd.xlane.f32.xlu0 %v556
        %v558 = vpop.xlane.xlu0 %557
        %v559 = vsel %vm343, %v551, 0.0
        %560 = vadd.xlane.f32.xlu0 %v559
        %v561 = vpop.xlane.xlu0 %560
        %v562 = vsel %vm343, %v553, 0.0
        %563 = vadd.xlane.f32.xlu0 %v562
        %v564 = vpop.xlane.xlu0 %563
        %v565 = vsel %vm343, %v555, 0.0
        %566 = vadd.xlane.f32.xlu0 %v565
        %v567 = vpop.xlane.xlu0 %566
        %v568 = vrcp.pop %v558
        %v569 = vrcp.pop %v561
        %v570 = vrcp.pop %v564
        %v571 = vrcp.pop %v567
        %v572 = vmul.f32 %v549, %v568
        %v573 = vmul.f32 %v551, %v569
        %v574 = vmul.f32 %v553, %v570
        %v575 = vmul.f32 %v555, %v571
        %v577 = vsel %vm343, %v303, 0
        %v580 = vsel %vm343, %v572, 0
        %582 = vmatpush.xpose.msra.mxu0 0.0
        %583 = vmatpush.xpose.msra.mxu0 0.0
        %584 = vmatpush.xpose.msra.mxu0 0.0
        %585 = vmatpush.xpose.msra.mxu0 0.0
        %586 = vmatpush.xpose.msra.mxu0 0.0
        %587 = vmatpush.xpose.msra.mxu0 0.0
        %588 = vmatpush.xpose.msra.mxu0 0.0
        %589 = vmatpush.xpose.msra.mxu0 0.0
        %590 = vmatpush.xpose.msra.mxu0 0.0
        %591 = vmatpush.xpose.msra.mxu0 0.0
        %592 = vmatpush.xpose.msra.mxu0 0.0
        %593 = vmatpush.xpose.msra.mxu0 0.0
        %594 = vmatpush.xpose.msra.mxu0 0.0
        %595 = vmatpush.xpose.msra.mxu0 0.0
        %596 = vmatpush.xpose.msra.mxu0 0.0
        %597 = vmatpush.xpose.msra.mxu0 %v580
        %598 = vmatmul.f32.gmra.mxu0 %v577
        %v599 = vpop.f32.mrf.mxu0
        %v600 = vadd.f32 0.0, %v599
        %601 = vdwg.mxu0
        %v603 = vsel %vm343, %v304, 0
        %v606 = vsel %vm343, %v573, 0
        %608 = vmatpush.xpose.msra.mxu0 0.0
        %609 = vmatpush.xpose.msra.mxu0 0.0
        %610 = vmatpush.xpose.msra.mxu0 0.0
        %611 = vmatpush.xpose.msra.mxu0 0.0
        %612 = vmatpush.xpose.msra.mxu0 0.0
        %613 = vmatpush.xpose.msra.mxu0 0.0
        %614 = vmatpush.xpose.msra.mxu0 0.0
        %615 = vmatpush.xpose.msra.mxu0 0.0
        %616 = vmatpush.xpose.msra.mxu0 0.0
        %617 = vmatpush.xpose.msra.mxu0 0.0
        %618 = vmatpush.xpose.msra.mxu0 0.0
        %619 = vmatpush.xpose.msra.mxu0 0.0
        %620 = vmatpush.xpose.msra.mxu0 0.0
        %621 = vmatpush.xpose.msra.mxu0 0.0
        %622 = vmatpush.xpose.msra.mxu0 0.0
        %623 = vmatpush.xpose.msra.mxu0 %v606
        %624 = vmatmul.f32.gmra.mxu0 %v603
        %v625 = vpop.f32.mrf.mxu0
        %v626 = vadd.f32 0.0, %v625
        %627 = vdwg.mxu0
        %v629 = vsel %vm343, %v305, 0
        %v632 = vsel %vm343, %v574, 0
        %634 = vmatpush.xpose.msra.mxu0 0.0
        %635 = vmatpush.xpose.msra.mxu0 0.0
        %636 = vmatpush.xpose.msra.mxu0 0.0
        %637 = vmatpush.xpose.msra.mxu0 0.0
        %638 = vmatpush.xpose.msra.mxu0 0.0
        %639 = vmatpush.xpose.msra.mxu0 0.0
        %640 = vmatpush.xpose.msra.mxu0 0.0
        %641 = vmatpush.xpose.msra.mxu0 0.0
        %642 = vmatpush.xpose.msra.mxu0 0.0
        %643 = vmatpush.xpose.msra.mxu0 0.0
        %644 = vmatpush.xpose.msra.mxu0 0.0
        %645 = vmatpush.xpose.msra.mxu0 0.0
        %646 = vmatpush.xpose.msra.mxu0 0.0
        %647 = vmatpush.xpose.msra.mxu0 0.0
        %648 = vmatpush.xpose.msra.mxu0 0.0
        %649 = vmatpush.xpose.msra.mxu0 %v632
        %650 = vmatmul.f32.gmra.mxu0 %v629
        %v651 = vpop.f32.mrf.mxu0
        %v652 = vadd.f32 0.0, %v651
        %653 = vdwg.mxu0
        %v655 = vsel %vm343, %v306, 0
        %v658 = vsel %vm343, %v575, 0
        %660 = vmatpush.xpose.msra.mxu0 0.0
        %661 = vmatpush.xpose.msra.mxu0 0.0
        %662 = vmatpush.xpose.msra.mxu0 0.0
        %663 = vmatpush.xpose.msra.mxu0 0.0
        %664 = vmatpush.xpose.msra.mxu0 0.0
        %665 = vmatpush.xpose.msra.mxu0 0.0
        %666 = vmatpush.xpose.msra.mxu0 0.0
        %667 = vmatpush.xpose.msra.mxu0 0.0
        %668 = vmatpush.xpose.msra.mxu0 0.0
        %669 = vmatpush.xpose.msra.mxu0 0.0
        %670 = vmatpush.xpose.msra.mxu0 0.0
        %671 = vmatpush.xpose.msra.mxu0 0.0
        %672 = vmatpush.xpose.msra.mxu0 0.0
        %673 = vmatpush.xpose.msra.mxu0 0.0
        %674 = vmatpush.xpose.msra.mxu0 0.0
        %675 = vmatpush.xpose.msra.mxu0 %v658
        %676 = vmatmul.f32.gmra.mxu0 %v655
        %v677 = vpop.f32.mrf.mxu0
        %v678 = vadd.f32 0.0, %v677
        %679 = vdwg.mxu0
        %680 = vxpose.xlu0.b32.start [1/16] %v600, 128
        %681 = vxpose.xlu0.b32.cont [2/16] %v626, 128
        %682 = vxpose.xlu0.b32.cont [3/16] %v652, 128
        %683 = vxpose.xlu0.b32.cont [4/16] %v678, 128
        %684 = vxpose.xlu0.b32.cont [5/16] 0.0, 128
        %685 = vxpose.xlu0.b32.cont [6/16] 0.0, 128
        %686 = vxpose.xlu0.b32.cont [7/16] 0.0, 128
        %687 = vxpose.xlu0.b32.cont [8/16] 0.0, 128
        %688 = vxpose.xlu0.b32.cont [9/16] 0.0, 128
        %689 = vxpose.xlu0.b32.cont [10/16] 0.0, 128
        %690 = vxpose.xlu0.b32.cont [11/16] 0.0, 128
        %691 = vxpose.xlu0.b32.cont [12/16] 0.0, 128
        %692 = vxpose.xlu0.b32.cont [13/16] 0.0, 128
        %693 = vxpose.xlu0.b32.cont [14/16] 0.0, 128
        %694 = vxpose.xlu0.b32.cont [15/16] 0.0, 128
        %695 = vxpose.xlu0.b32.end [16/16] 0.0, 128
        %v696 = vpop.trf.xlu0
        %v697 = vpop.trf.xlu0
        %v698 = vpop.trf.xlu0
        %v699 = vpop.trf.xlu0
        %v700 = vpop.trf.xlu0
        %v701 = vpop.trf.xlu0
        %v702 = vpop.trf.xlu0
        %v703 = vpop.trf.xlu0
        %v704 = vpop.trf.xlu0
        %v705 = vpop.trf.xlu0
        %v706 = vpop.trf.xlu0
        %v707 = vpop.trf.xlu0
        %v708 = vpop.trf.xlu0
        %v709 = vpop.trf.xlu0
        %v710 = vpop.trf.xlu0
        %v711 = vpop.trf.xlu0
        %v712 = vpack.c.bf16 %v696, %v696
        %v717 = vunpack.c.l.b16 %v226
        %v718 = vunpack.c.l.b16 %v227
        %v719 = vunpack.c.l.b16 %v228
        %v720 = vunpack.c.l.b16 %v229
        %v721 = vpack.c.b16 %v718, %v717
        %v722 = vpack.c.b16 %v720, %v719
        %v726 = vsel %vm256, %v712, 0
        %728 = vmatpush.bf16.msra.mxu0 0
        %729 = vmatpush.bf16.msra.mxu0 0
        %730 = vmatpush.bf16.msra.mxu0 0
        %731 = vmatpush.bf16.msra.mxu0 0
        %732 = vmatpush.bf16.msra.mxu0 0
        %733 = vmatpush.bf16.msra.mxu0 0
        %734 = vmatpush.bf16.msra.mxu0 %v722
        %735 = vmatpush.bf16.msra.mxu0 %v721
        %736 = vmatmul.bf16.gmra.mxu0 %v726
        %v737 = vpop.f32.mrf.mxu0
        %v738 = vadd.f32 0.0, %v737
        %v739 = vpop.f32.mrf.mxu0
        %740 = vdwg.mxu0
        %v741 = vperm.slane %v242, 1
        %v742 = vadd.f32 %v738, %v741
        %v743 = vadd.f32 %v742, %v220
        %v744 = vsel %vm256, %v743, 0.0
        %745 = vadd.xlane.f32.xlu0 %v744
        %v746 = vpop.xlane.xlu0 %745
        %v747 = vrcp.pop 32.0
        %v748 = vmul.f32 32.0, %v747
        %v749 = vsub.f32 1.0, %v748
        %v750 = vmul.f32 %v747, %v749
        %v751 = vadd.f32 %v747, %v750
        %vm752 = vweird.f32 %v747
        %v753 = vsel %vm752, %v747, %v751
        %v754 = vmul.f32 %v746, %v753
        %v755 = vsub.f32 %v743, %v754
        %v756 = vmul.f32 %v755, %v755
        %v757 = vsel %vm256, %v756, 0.0
        %758 = vadd.xlane.f32.xlu0 %v757
        %v759 = vpop.xlane.xlu0 %758
        %v760 = vmul.f32 %v759, 0.032258064
        %v761 = vrsqrt.pop %v760
        %v762 = vmul.f32 %v761, %v760
        %v763 = vmul.f32 %v762, %v761
        %v764 = vmul.f32 0.5, %v763
        %v765 = vsub.f32 1.5, %v764
        %v766 = vmul.f32 %v761, %v765
        %v767 = vmul.f32 %v760, %v766
        %vm768 = vcmp.eq.f32.partialorder %v760, inf
        %v769 = vsel %vm768, %v760, %v767
        %vm770 = vcmp.eq.f32.partialorder %v760, 0.0
        %v771 = vand.u32 %v760, 2147483648
        %v772 = vsel %vm770, %v771, %v769
        %v773 = vadd.f32 %v772, 1e-06
        %v774 = vrcp.pop %v773
        %v775 = vmul.f32 %v755, %v774
        %v776 = vperm.slane %v242, 4
        %v777 = vmul.f32 %v776, %v775
        %v778 = vperm.slane %v242, 5
        %v779 = vadd.f32 %v777, %v778
        %v780 = vpack.c.bf16 %v779, %v779
        %v785 = vunpack.c.l.b16 %v230
        %v786 = vunpack.c.l.b16 %v231
        %v787 = vunpack.c.l.b16 %v232
        %v788 = vunpack.c.l.b16 %v233
        %v789 = vpack.c.b16 %v786, %v785
        %v790 = vpack.c.b16 %v788, %v787
        %v794 = vsel %vm256, %v780, 0
        %796 = vmatpush.bf16.msra.mxu0 0
        %797 = vmatpush.bf16.msra.mxu0 0
        %798 = vmatpush.bf16.msra.mxu0 0
        %799 = vmatpush.bf16.msra.mxu0 0
        %800 = vmatpush.bf16.msra.mxu0 0
        %801 = vmatpush.bf16.msra.mxu0 0
        %802 = vmatpush.bf16.msra.mxu0 %v790
        %803 = vmatpush.bf16.msra.mxu0 %v789
        %804 = vmatmul.bf16.gmra.mxu0 %v794
        %v805 = vpop.f32.mrf.mxu0
        %v806 = vadd.f32 0.0, %v805
        %v807 = vpop.f32.mrf.mxu0
        %808 = vdwg.mxu0
        %v809 = vperm.slane %v242, 2
        %v810 = vadd.f32 %v806, %v809
        %v811 = vmul.f32 %v810, 0.5
        %v812 = vmul.f32 %v810, 0.7978846
        %v813 = vmul.f32 %v810, 0.044715
        %v814 = vmul.f32 %v813, %v810
        %v815 = vadd.f32 %v814, 1.0
        %v816 = vmul.f32 %v812, %v815
        %v817 = vtanh.pop %v816
        %v818 = vadd.f32 %v817, 1.0
        %v819 = vmul.f32 %v811, %v818
        %v820 = vpack.c.bf16 %v819, %v819
        %v829 = vunpack.c.l.b16 %v234
        %v830 = vunpack.c.l.b16 %v235
        %v831 = vunpack.c.l.b16 %v236
        %v832 = vunpack.c.l.b16 %v237
        %v833 = vunpack.c.l.b16 %v238
        %v834 = vunpack.c.l.b16 %v239
        %v835 = vunpack.c.l.b16 %v240
        %v836 = vunpack.c.l.b16 %v241
        %v837 = vpack.c.b16 %v830, %v829
        %v838 = vpack.c.b16 %v832, %v831
        %v839 = vpack.c.b16 %v834, %v833
        %v840 = vpack.c.b16 %v836, %v835
        %vm845 = vcmask 523264
        %v847 = vsel %vm845, %v820, 0
        %849 = vmatpush.bf16.msra.mxu0 0
        %850 = vmatpush.bf16.msra.mxu0 0
        %851 = vmatpush.bf16.msra.mxu0 0
        %852 = vmatpush.bf16.msra.mxu0 0
        %853 = vmatpush.bf16.msra.mxu0 %v840
        %854 = vmatpush.bf16.msra.mxu0 %v839
        %855 = vmatpush.bf16.msra.mxu0 %v838
        %856 = vmatpush.bf16.msra.mxu0 %v837
        %857 = vmatmul.bf16.gmra.mxu0 %v847
        %v858 = vpop.f32.mrf.mxu0
        %v859 = vadd.f32 0.0, %v858
        %v860 = vpop.f32.mrf.mxu0
        %861 = vdwg.mxu0
        %v862 = vperm.slane %v242, 3
        %v863 = vadd.f32 %v859, %v862
        %v864 = vadd.f32 %v863, %v779
        %v865 = vsel %vm256, %v864, 0.0
        %866 = vadd.xlane.f32.xlu0 %v865
        %v867 = vpop.xlane.xlu0 %866
        %v868 = vmul.f32 %v867, %v753
        %v869 = vsub.f32 %v864, %v868
        %v870 = vmul.f32 %v869, %v869
        %v871 = vsel %vm256, %v870, 0.0
        %872 = vadd.xlane.f32.xlu0 %v871
        %v873 = vpop.xlane.xlu0 %872
        %v874 = vmul.f32 %v873, 0.032258064
        %v875 = vrsqrt.pop %v874
        %v876 = vmul.f32 %v875, %v874
        %v877 = vmul.f32 %v876, %v875
        %v878 = vmul.f32 0.5, %v877
        %v879 = vsub.f32 1.5, %v878
        %v880 = vmul.f32 %v875, %v879
        %v881 = vmul.f32 %v874, %v880
        %vm882 = vcmp.eq.f32.partialorder %v874, inf
        %v883 = vsel %vm882, %v874, %v881
        %vm884 = vcmp.eq.f32.partialorder %v874, 0.0
        %v885 = vand.u32 %v874, 2147483648
        %v886 = vsel %vm884, %v885, %v883
        %v887 = vadd.f32 %v886, 1e-06
        %v888 = vrcp.pop %v887
        %v889 = vmul.f32 %v869, %v888
        %v890 = vperm.slane %v242, 6
        %v891 = vmul.f32 %v890, %v889
        %v892 = vperm.slane %v242, 7
        %v893 = vadd.f32 %v891, %v892
        %894 = vst.msk [vmem:[%s218] sm:$0xff] %vm256, %v893
        %s895 = sand.u32 %s97, 1
        %s896 = scalar_lea.sflag [#allocation4], %s895
        %s897 = sand.u32 %s97, 1
        %s898 = smul.addr %s897, 8
        %s899 = scalar_lea.vmem [#allocation8], %s898
        // Predicated region
        $region45: #{tpu_custom_call.1} parent=31 // pred_check
          %p900 = pneg %p107
        $region46: #{tpu_custom_call.1} parent=31 // pred_check_branch
          %902 = sbr.rel (%p900) target = $region48
        $region47: #{tpu_custom_call.1} parent=31 // pred_region
          %904 = vsyncadd %s896, 0
          %s905 = smul.addr %s21, 8
          %s906 = scalar_lea.hbm %s3, %s905
          %s908 = sshll.u32 %s899, 4
          %s909 = int_to_ptr.vmem [resolvable:$true] %s908
          %s910 = sshll.u32 %s906, 4
          %s911 = int_to_ptr.hbm [resolvable:$true] %s910
          %913 = dma.vmem_to_hbm [thread:$0]  %s909, 128, %s911, %s896
        $region48: #{tpu_custom_call.1} parent=31 // pred_fallthru
          _
      $region32: #{tpu_custom_call.1} parent=5 // pred_fallthru
        _
      %p914 = scmp.le.s32.totalorder 2, %s16
      // Predicated region
      $region49: #{tpu_custom_call.1} parent=5 // pred_check
        %p915 = pneg %p914
      $region50: #{tpu_custom_call.1} parent=5 // pred_check_branch
        %917 = sbr.rel (%p915) target = $region52
      $region51: #{tpu_custom_call.1} parent=5 // pred_region
        %s918 = ssub.s32 %s16, 2
        // Predicated region
        $region53: #{tpu_custom_call.1} parent=51 // pred_check
          %p919 = pneg %p113
        $region54: #{tpu_custom_call.1} parent=51 // pred_check_branch
          %921 = sbr.rel (%p919) target = $region56
        $region55: #{tpu_custom_call.1} parent=51 // pred_region
          %s922 = sand.u32 %s98, 1
          %s923 = scalar_lea.sflag [#allocation4], %s922
          %s924 = sand.u32 %s98, 1
          %s925 = smul.addr %s924, 8
          %s926 = scalar_lea.vmem [#allocation8], %s925
          %928 = dma.done %s923, 128
        $region56: #{tpu_custom_call.1} parent=51 // pred_fallthru
          _
      $region52: #{tpu_custom_call.1} parent=5 // pred_fallthru
        _
    $region6: #{tpu_custom_call.1} parent=1 // loop_footer
      %s20 = sadd.s32 1, %s16
    $region7: #{tpu_custom_call.1} parent=1 // loop_footer_branch
      %15 = sbr.rel target = $region3
    $region8: #{tpu_custom_call.1} parent=1 // loop_exit
      _
    %929 = vsyncpa [#allocation3], 1
    %s930 = scalar_lea.sflag [#allocation3], 1
    %931 = vsyncpa %s930, 1
    %932 = vsyncpa [#allocation6], 1
    %933 = vsyncpa [#allocation4], 1
    %s934 = scalar_lea.sflag [#allocation4], 1
    %935 = vsyncpa %s934, 1

</llo_original>
